<compile_context>
chip_gen: v7x
topology: tpu7x:2x2x1
jax: 0.10.0
libtpu: 0.0.40
codegen_flags: <defaults>
</compile_context>

<pallas_src>
import jax
import jax.numpy as jnp
from jax.experimental import pallas as pl
from jax.experimental.pallas import tpu as pltpu

SELU_ALPHA = 1.6732632423543772
SELU_SCALE = 1.0507009873554805


def _selu(x):
    return SELU_SCALE * jnp.where(x > 0, x, SELU_ALPHA * (jnp.exp(x) - 1.0))


def _vmem():
    return pl.BlockSpec(memory_space=pltpu.MemorySpace.VMEM)


# ---------------------------------------------------------------------------
# Fused classifier kernel:  x @ W1 + b1 -> SELU -> @ W2 + b2 -> log_softmax
# ---------------------------------------------------------------------------
def clf_v1_kernel(x_ref, w1_ref, b1_ref, w2_ref, b2_ref, out_ref):
    # x: (B, N)  w1: (N, 64)  b1: (1, 64)  w2: (64, 4)  b2: (1, 4)  out: (B, 4)
    h = jnp.dot(x_ref[...], w1_ref[...],
                preferred_element_type=jnp.float32) + b1_ref[...]
    h = _selu(h)

    logits = jnp.dot(h, w2_ref[...],
                     preferred_element_type=jnp.float32) + b2_ref[...]

    # numerically stable log-softmax over the class axis (dim=1)
    m = jnp.max(logits, axis=-1, keepdims=True)
    s = logits - m
    lse = jnp.log(jnp.sum(jnp.exp(s), axis=-1, keepdims=True))
    out_ref[...] = s - lse


def clf_v1_forward(x, params):
    """x: (B, n_input_neurons) float32 -> log-probabilities (B, 4)."""
    B = x.shape[0]
    return pl.pallas_call(
        clf_v1_kernel,
        out_shape=jax.ShapeDtypeStruct((B, 4), jnp.float32),
        in_specs=[_vmem()] * 5,
        out_specs=_vmem(),
    )(x, params['w1'], params['b1'], params['w2'], params['b2'])


# ---------------------------------------------------------------------------
# Deterministic parameters (PyTorch nn.Linear-style uniform init), weights
# stored pre-transposed as (in_features, out_features) for the kernel.
# ---------------------------------------------------------------------------
def make_params(key, n_input_neurons, hidden=64, n_classes=4):
    k1, k2, k3, k4 = jax.random.split(key, 4)

    def lin(kw, kb, fan_in, fan_out):
        bound = 1.0 / jnp.sqrt(jnp.float32(fan_in))
        w = jax.random.uniform(kw, (fan_in, fan_out), jnp.float32, -bound, bound)
        b = jax.random.uniform(kb, (1, fan_out), jnp.float32, -bound, bound)
        return w, b

    w1, b1 = lin(k1, k2, n_input_neurons, hidden)
    w2, b2 = lin(k3, k4, hidden, n_classes)
    return {'w1': w1, 'b1': b1, 'w2': w2, 'b2': b2}


# Pure-JAX reference (mirrors the PyTorch module exactly).
def clf_v1_reference(x, params):
    h = _selu(x @ params['w1'] + params['b1'])
    logits = h @ params['w2'] + params['b2']
    return jax.nn.log_softmax(logits, axis=1)


if __name__ == "__main__":
    B, N = 2, 256
    key = jax.random.PRNGKey(0)
    kx, kp = jax.random.split(key)

    x = jax.random.normal(kx, (B, N), dtype=jnp.float32)
    params = make_params(kp, N)

    out = jax.jit(clf_v1_forward)(x, params)
    jax.block_until_ready(out)

    ref = clf_v1_reference(x, params)

    assert out.shape == (B, 4)
    assert bool(jnp.all(jnp.isfinite(out)))
    # log-softmax rows must exponentiate to probability distributions
    assert bool(jnp.allclose(jnp.sum(jnp.exp(out), axis=1), 1.0, atol=1e-5))
    # match the pure-JAX reference
    assert bool(jnp.allclose(out, ref, atol=1e-5, rtol=1e-5))

    print("KERNEL_OK")
</pallas_src>

<mosaic_0001>
module attributes {stable_mosaic.version = 11 : i64} {
  func.func @clf_v1_kernel(%arg0: memref<2x256xf32, #tpu.memory_space<vmem>>, %arg1: memref<256x64xf32, #tpu.memory_space<vmem>>, %arg2: memref<1x64xf32, #tpu.memory_space<vmem>>, %arg3: memref<64x4xf32, #tpu.memory_space<vmem>>, %arg4: memref<1x4xf32, #tpu.memory_space<vmem>>, %arg5: memref<2x4xf32, #tpu.memory_space<vmem>>) attributes {dimension_semantics = [], scalar_prefetch = 0 : i64, scratch_operands = 0 : i64, tpu.core_type = #tpu.core_type<tc>} {
    %c0 = arith.constant 0 : index
    %c0_0 = arith.constant 0 : index
    %0 = vector.load %arg0[%c0, %c0_0] : memref<2x256xf32, #tpu.memory_space<vmem>>, vector<2x256xf32>
    %c0_1 = arith.constant 0 : index
    %c0_2 = arith.constant 0 : index
    %1 = vector.load %arg1[%c0_1, %c0_2] : memref<256x64xf32, #tpu.memory_space<vmem>>, vector<256x64xf32>
    %cst = arith.constant dense<0.000000e+00> : vector<2x64xf32>
    %2 = tpu.matmul %0, %1, %cst {dimension_numbers = #tpu.dot_dimension_numbers<[1], [0], [0], [1], [0, 0, 1, 1], [], []>} : vector<2x256xf32>, vector<256x64xf32>, vector<2x64xf32> -> vector<2x64xf32>
    %c0_3 = arith.constant 0 : index
    %c0_4 = arith.constant 0 : index
    %3 = vector.load %arg2[%c0_3, %c0_4] : memref<1x64xf32, #tpu.memory_space<vmem>>, vector<1x64xf32>
    %4 = vector.broadcast %3 : vector<1x64xf32> to vector<2x64xf32>
    %5 = arith.addf %2, %4 : vector<2x64xf32>
    %cst_5 = arith.constant 0.000000e+00 : f32
    %6 = vector.broadcast %cst_5 : f32 to vector<2x64xf32>
    %7 = arith.cmpf ogt, %5, %6 : vector<2x64xf32>
    %8 = math.exp %5 : vector<2x64xf32>
    %cst_6 = arith.constant 1.000000e+00 : f32
    %9 = vector.broadcast %cst_6 : f32 to vector<2x64xf32>
    %10 = arith.subf %8, %9 : vector<2x64xf32>
    %cst_7 = arith.constant 1.67326319 : f32
    %11 = vector.broadcast %cst_7 : f32 to vector<2x64xf32>
    %12 = arith.mulf %11, %10 : vector<2x64xf32>
    %13 = arith.select %7, %5, %12 : vector<2x64xi1>, vector<2x64xf32>
    %cst_8 = arith.constant 1.05070102 : f32
    %14 = vector.broadcast %cst_8 : f32 to vector<2x64xf32>
    %15 = arith.mulf %14, %13 : vector<2x64xf32>
    %c0_9 = arith.constant 0 : index
    %c0_10 = arith.constant 0 : index
    %16 = vector.load %arg3[%c0_9, %c0_10] : memref<64x4xf32, #tpu.memory_space<vmem>>, vector<64x4xf32>
    %cst_11 = arith.constant dense<0.000000e+00> : vector<2x4xf32>
    %17 = tpu.matmul %15, %16, %cst_11 {dimension_numbers = #tpu.dot_dimension_numbers<[1], [0], [0], [1], [0, 0, 1, 1], [], []>} : vector<2x64xf32>, vector<64x4xf32>, vector<2x4xf32> -> vector<2x4xf32>
    %c0_12 = arith.constant 0 : index
    %c0_13 = arith.constant 0 : index
    %18 = vector.load %arg4[%c0_12, %c0_13] : memref<1x4xf32, #tpu.memory_space<vmem>>, vector<1x4xf32>
    %19 = vector.broadcast %18 : vector<1x4xf32> to vector<2x4xf32>
    %20 = arith.addf %17, %19 : vector<2x4xf32>
    %cst_14 = arith.constant dense<0xFF800000> : vector<2xf32>
    %21 = vector.multi_reduction <maximumf>, %20, %cst_14 [1] : vector<2x4xf32> to vector<2xf32>
    %22 = vector.shape_cast %21 : vector<2xf32> to vector<2x1xf32>
    %23 = vector.broadcast %22 : vector<2x1xf32> to vector<2x4xf32>
    %24 = arith.subf %20, %23 : vector<2x4xf32>
    %25 = math.exp %24 : vector<2x4xf32>
    %cst_15 = arith.constant dense<0.000000e+00> : vector<2xf32>
    %26 = vector.multi_reduction <add>, %25, %cst_15 [1] : vector<2x4xf32> to vector<2xf32>
    %27 = vector.shape_cast %26 : vector<2xf32> to vector<2x1xf32>
    %28 = math.log %27 : vector<2x1xf32>
    %29 = vector.broadcast %28 : vector<2x1xf32> to vector<2x4xf32>
    %30 = arith.subf %24, %29 : vector<2x4xf32>
    %c0_16 = arith.constant 0 : index
    %c0_17 = arith.constant 0 : index
    %31 = vector.load %arg5[%c0_16, %c0_17] : memref<2x4xf32, #tpu.memory_space<vmem>>, vector<2x4xf32>
    tpu.vector_store %arg5[%c0_16, %c0_17], %30 {strides = array<i32>} : memref<2x4xf32, #tpu.memory_space<vmem>>, vector<2x4xf32>,
    return
  }
}

</mosaic_0001>

<llo_original>
// kernel: clf_v1_forward.1
$region0: #{clf_v1_forward.1}
  #allocation0 [shape = 'u32[]', space=smem, size = 0x4, offset = 0x4, fixed_abs, tag = 'smem constant byte address 0x4 - core index']
  #allocation1 [shape = 'u32[144,128]{1,0:T(1,128)}', space=vmem, size = 0x12000, scoped, tag = 'internal scratch']
  %s0 = inlined_call_operand.vmem [shape: f32[2,256], index: 0, kind: input, shape index: {}]
  %s1 = inlined_call_operand.vmem [shape: f32[256,64], index: 1, kind: input, shape index: {}]
  %s2 = inlined_call_operand.vmem [shape: f32[1,64], index: 2, kind: input, shape index: {}]
  %s3 = inlined_call_operand.vmem [shape: f32[64,4], index: 3, kind: input, shape index: {}]
  %s4 = inlined_call_operand.vmem [shape: f32[1,4], index: 4, kind: input, shape index: {}]
  %s5 = inlined_call_operand.hbm [shape: f32[2,4], index: 5, kind: output, shape index: {}]
  %s6 = sld [smem:[#allocation0]]
  $region30: #{clf_v1_forward.1} parent=0
    _
  %s8 = ssub.s32 1, %s6
  %s9 = scalar_select 0, %s8, %s6
  $region1: #{clf_v1_forward.1} parent=0
    #allocation2 [shape = 'u8[1024]{0}', space=vmem, size = 0x400, scoped, tag = 'output window, operand 0, single buffered']
    #allocation3 [shape = 's32[1]{0}', space=sflag, size = 0x4, scoped, tag = 'scoped memory for clf_v1_forward.1']
    %10 = vsyncpa [#allocation3], 0
    // Predicated region
    $region2: #{clf_v1_forward.1} parent=1 // pred_check
      _
    $region3: #{clf_v1_forward.1} parent=1 // pred_check_branch
      %12 = sbr.rel (0) target = $region5
    $region4: #{clf_v1_forward.1} parent=1 // pred_region
      _
    $region5: #{clf_v1_forward.1} parent=1 // pred_fallthru
      _
    // Predicated region
    $region6: #{clf_v1_forward.1} parent=1 // pred_check
      _
    $region7: #{clf_v1_forward.1} parent=1 // pred_check_branch
      %14 = sbr.rel (0) target = $region9
    $region8: #{clf_v1_forward.1} parent=1 // pred_region
      _
    $region9: #{clf_v1_forward.1} parent=1 // pred_fallthru
      _
    // Predicated region
    $region10: #{clf_v1_forward.1} parent=1 // pred_check
      _
    $region11: #{clf_v1_forward.1} parent=1 // pred_check_branch
      %16 = sbr.rel (0) target = $region13
    $region12: #{clf_v1_forward.1} parent=1 // pred_region
      _
    $region13: #{clf_v1_forward.1} parent=1 // pred_fallthru
      _
    // Predicated region
    $region14: #{clf_v1_forward.1} parent=1 // pred_check
      _
    $region15: #{clf_v1_forward.1} parent=1 // pred_check_branch
      %18 = sbr.rel (0) target = $region17
    $region16: #{clf_v1_forward.1} parent=1 // pred_region
      _
    $region17: #{clf_v1_forward.1} parent=1 // pred_fallthru
      _
    // Predicated region
    $region18: #{clf_v1_forward.1} parent=1 // pred_check
      _
    $region19: #{clf_v1_forward.1} parent=1 // pred_check_branch
      %20 = sbr.rel (0) target = $region21
    $region20: #{clf_v1_forward.1} parent=1 // pred_region
      _
    $region21: #{clf_v1_forward.1} parent=1 // pred_fallthru
      _
    %v21 = vld [vmem:[%s0] sm:$0xf]
    %v22 = vld [vmem:[%s1] sm:$0xff]
    %v23 = vld [vmem:[%s1 + $0x8] sm:$0xff]
    %v24 = vld [vmem:[%s1 + $0x10] sm:$0xff]
    %v25 = vld [vmem:[%s1 + $0x18] sm:$0xff]
    %v26 = vld [vmem:[%s1 + $0x20] sm:$0xff]
    %v27 = vld [vmem:[%s1 + $0x28] sm:$0xff]
    %v28 = vld [vmem:[%s1 + $0x30] sm:$0xff]
    %v29 = vld [vmem:[%s1 + $0x38] sm:$0xff]
    %v30 = vld [vmem:[%s1 + $0x40] sm:$0xff]
    %v31 = vld [vmem:[%s1 + $0x48] sm:$0xff]
    %v32 = vld [vmem:[%s1 + $0x50] sm:$0xff]
    %v33 = vld [vmem:[%s1 + $0x58] sm:$0xff]
    %v34 = vld [vmem:[%s1 + $0x60] sm:$0xff]
    %v35 = vld [vmem:[%s1 + $0x68] sm:$0xff]
    %v36 = vld [vmem:[%s1 + $0x70] sm:$0xff]
    %v37 = vld [vmem:[%s1 + $0x78] sm:$0xff]
    %v38 = vld [vmem:[%s1 + $0x80] sm:$0xff]
    %v39 = vld [vmem:[%s1 + $0x88] sm:$0xff]
    %v40 = vld [vmem:[%s1 + $0x90] sm:$0xff]
    %v41 = vld [vmem:[%s1 + $0x98] sm:$0xff]
    %v42 = vld [vmem:[%s1 + $0xa0] sm:$0xff]
    %v43 = vld [vmem:[%s1 + $0xa8] sm:$0xff]
    %v44 = vld [vmem:[%s1 + $0xb0] sm:$0xff]
    %v45 = vld [vmem:[%s1 + $0xb8] sm:$0xff]
    %v46 = vld [vmem:[%s1 + $0xc0] sm:$0xff]
    %v47 = vld [vmem:[%s1 + $0xc8] sm:$0xff]
    %v48 = vld [vmem:[%s1 + $0xd0] sm:$0xff]
    %v49 = vld [vmem:[%s1 + $0xd8] sm:$0xff]
    %v50 = vld [vmem:[%s1 + $0xe0] sm:$0xff]
    %v51 = vld [vmem:[%s1 + $0xe8] sm:$0xff]
    %v52 = vld [vmem:[%s1 + $0xf0] sm:$0xff]
    %v53 = vld [vmem:[%s1 + $0xf8] sm:$0xff]
    %v54 = vld [vmem:[%s2] sm:$0x1]
    %v56 = vlaneseq
    %v57 = vshrl.u32 %v56, 7
    %v58 = vsub.s32 0, %v57
    %v59 = vrot.slane %v54, %v58
    %v63 = vunpack.c.l.s4 1983009808
    %v64 = vunpack.c.0.s8 %v63
    %v65 = vlaneseq
    %v66 = vshrl.u32 %v65, 7
    %v67 = vsub.s32 %v64, %v66
    %v68 = vrot.slane %v21, %v67
    %v69 = vcombine.high %v68, %v68
    %72 = vmatprep.subr.mxu0 0.0
    %73 = vmatpush1.msra.mxu0 %v22
    %74 = vmatprep.subr.mxu0 0.0
    %75 = vmatpush1.msra.mxu0 %v23
    %76 = vmatprep.subr.mxu0 0.0
    %77 = vmatpush1.msra.mxu0 %v24
    %78 = vmatprep.subr.mxu0 0.0
    %79 = vmatpush1.msra.mxu0 %v25
    %80 = vmatprep.subr.mxu0 0.0
    %81 = vmatpush1.msra.mxu0 %v26
    %82 = vmatprep.subr.mxu0 0.0
    %83 = vmatpush1.msra.mxu0 %v27
    %84 = vmatprep.subr.mxu0 0.0
    %85 = vmatpush1.msra.mxu0 %v28
    %86 = vmatprep.subr.mxu0 0.0
    %87 = vmatpush1.msra.mxu0 %v29
    %88 = vmatprep.subr.mxu0 0.0
    %89 = vmatpush1.msra.mxu0 %v30
    %90 = vmatprep.subr.mxu0 0.0
    %91 = vmatpush1.msra.mxu0 %v31
    %92 = vmatprep.subr.mxu0 0.0
    %93 = vmatpush1.msra.mxu0 %v32
    %94 = vmatprep.subr.mxu0 0.0
    %95 = vmatpush1.msra.mxu0 %v33
    %96 = vmatprep.subr.mxu0 0.0
    %97 = vmatpush1.msra.mxu0 %v34
    %98 = vmatprep.subr.mxu0 0.0
    %99 = vmatpush1.msra.mxu0 %v35
    %100 = vmatprep.subr.mxu0 0.0
    %101 = vmatpush1.msra.mxu0 %v36
    %102 = vmatprep.subr.mxu0 0.0
    %103 = vmatpush1.msra.mxu0 %v37
    %104 = vmatprep.subr.mxu0 0.0
    %105 = vmatpush1.msra.mxu0 %v38
    %106 = vmatprep.subr.mxu0 0.0
    %107 = vmatpush1.msra.mxu0 %v39
    %108 = vmatprep.subr.mxu0 0.0
    %109 = vmatpush1.msra.mxu0 %v40
    %110 = vmatprep.subr.mxu0 0.0
    %111 = vmatpush1.msra.mxu0 %v41
    %112 = vmatprep.subr.mxu0 0.0
    %113 = vmatpush1.msra.mxu0 %v42
    %114 = vmatprep.subr.mxu0 0.0
    %115 = vmatpush1.msra.mxu0 %v43
    %116 = vmatprep.subr.mxu0 0.0
    %117 = vmatpush1.msra.mxu0 %v44
    %118 = vmatprep.subr.mxu0 0.0
    %119 = vmatpush1.msra.mxu0 %v45
    %120 = vmatprep.subr.mxu0 0.0
    %121 = vmatpush1.msra.mxu0 %v46
    %122 = vmatprep.subr.mxu0 0.0
    %123 = vmatpush1.msra.mxu0 %v47
    %124 = vmatprep.subr.mxu0 0.0
    %125 = vmatpush1.msra.mxu0 %v48
    %126 = vmatprep.subr.mxu0 0.0
    %127 = vmatpush1.msra.mxu0 %v49
    %128 = vmatprep.subr.mxu0 0.0
    %129 = vmatpush1.msra.mxu0 %v50
    %130 = vmatprep.subr.mxu0 0.0
    %131 = vmatpush1.msra.mxu0 %v51
    %132 = vmatprep.subr.mxu0 0.0
    %133 = vmatpush1.msra.mxu0 %v52
    %134 = vmatprep.subr.mxu0 0.0
    %135 = vmatpush1.msra.mxu0 %v53
    %136 = vmatprep.mubr.f32.mxu0 %v69
    %137 = vmatmul.mubr.f32.gmra.mrb[0].mxu0 %v68
    %v138 = vpop.f32.mrb[0].mxu0
    %v139 = vadd.f32 %v59, %v138
    %v140 = vpop.f32.mrb[0].mxu0
    %141 = vdwg.mxu0
    %vm142 = vcmp.gt.f32.partialorder %v139, 0.0
    %v143 = vmul.f32 %v139, 1.442695
    %v144 = vpow.pop %v143
    %v145 = vsub.f32 %v144, 1.0
    %v146 = vmul.f32 %v145, 1.6732632
    %v147 = vsel %vm142, %v139, %v146
    %v148 = vmul.f32 %v147, 1.050701
    %v149 = vld [vmem:[%s3] sm:$0xff]
    %v150 = vld [vmem:[%s3 + $0x8] sm:$0xff]
    %v151 = vld [vmem:[%s3 + $0x10] sm:$0xff]
    %v152 = vld [vmem:[%s3 + $0x18] sm:$0xff]
    %v153 = vld [vmem:[%s3 + $0x20] sm:$0xff]
    %v154 = vld [vmem:[%s3 + $0x28] sm:$0xff]
    %v155 = vld [vmem:[%s3 + $0x30] sm:$0xff]
    %v156 = vld [vmem:[%s3 + $0x38] sm:$0xff]
    %v157 = vld [vmem:[%s4] sm:$0x1]
    %v159 = vlaneseq
    %v160 = vshrl.u32 %v159, 7
    %v161 = vsub.s32 0, %v160
    %v162 = vrot.slane %v157, %v161
    %vm164 = vcmask 523264
    %v166 = vsel %vm164, %v148, 0
    %168 = vmatprep.subr.mxu0 0.0
    %169 = vmatpush1.msra.mxu0 %v149
    %170 = vmatprep.subr.mxu0 0.0
    %171 = vmatpush1.msra.mxu0 %v150
    %172 = vmatprep.subr.mxu0 0.0
    %173 = vmatpush1.msra.mxu0 %v151
    %174 = vmatprep.subr.mxu0 0.0
    %175 = vmatpush1.msra.mxu0 %v152
    %176 = vmatprep.subr.mxu0 0.0
    %177 = vmatpush1.msra.mxu0 %v153
    %178 = vmatprep.subr.mxu0 0.0
    %179 = vmatpush1.msra.mxu0 %v154
    %180 = vmatprep.subr.mxu0 0.0
    %181 = vmatpush1.msra.mxu0 %v155
    %182 = vmatprep.subr.mxu0 0.0
    %183 = vmatpush1.msra.mxu0 %v156
    %184 = vmatprep.subr.mxu0 0.0
    %185 = vmatpush1.msra.mxu0 0.0
    %186 = vmatprep.subr.mxu0 0.0
    %187 = vmatpush1.msra.mxu0 0.0
    %188 = vmatprep.subr.mxu0 0.0
    %189 = vmatpush1.msra.mxu0 0.0
    %190 = vmatprep.subr.mxu0 0.0
    %191 = vmatpush1.msra.mxu0 0.0
    %192 = vmatprep.subr.mxu0 0.0
    %193 = vmatpush1.msra.mxu0 0.0
    %194 = vmatprep.subr.mxu0 0.0
    %195 = vmatpush1.msra.mxu0 0.0
    %196 = vmatprep.subr.mxu0 0.0
    %197 = vmatpush1.msra.mxu0 0.0
    %198 = vmatprep.subr.mxu0 0.0
    %199 = vmatpush1.msra.mxu0 0.0
    %200 = vmatprep.subr.mxu0 0.0
    %201 = vmatpush1.msra.mxu0 0.0
    %202 = vmatprep.subr.mxu0 0.0
    %203 = vmatpush1.msra.mxu0 0.0
    %204 = vmatprep.subr.mxu0 0.0
    %205 = vmatpush1.msra.mxu0 0.0
    %206 = vmatprep.subr.mxu0 0.0
    %207 = vmatpush1.msra.mxu0 0.0
    %208 = vmatprep.subr.mxu0 0.0
    %209 = vmatpush1.msra.mxu0 0.0
    %210 = vmatprep.subr.mxu0 0.0
    %211 = vmatpush1.msra.mxu0 0.0
    %212 = vmatprep.subr.mxu0 0.0
    %213 = vmatpush1.msra.mxu0 0.0
    %214 = vmatprep.subr.mxu0 0.0
    %215 = vmatpush1.msra.mxu0 0.0
    %216 = vmatprep.subr.mxu0 0.0
    %217 = vmatpush1.msra.mxu0 0.0
    %218 = vmatprep.subr.mxu0 0.0
    %219 = vmatpush1.msra.mxu0 0.0
    %220 = vmatprep.subr.mxu0 0.0
    %221 = vmatpush1.msra.mxu0 0.0
    %222 = vmatprep.subr.mxu0 0.0
    %223 = vmatpush1.msra.mxu0 0.0
    %224 = vmatprep.subr.mxu0 0.0
    %225 = vmatpush1.msra.mxu0 0.0
    %226 = vmatprep.subr.mxu0 0.0
    %227 = vmatpush1.msra.mxu0 0.0
    %228 = vmatprep.subr.mxu0 0.0
    %229 = vmatpush1.msra.mxu0 0.0
    %230 = vmatprep.subr.mxu0 0.0
    %231 = vmatpush1.msra.mxu0 0.0
    %232 = vmatprep.mubr.f32.mxu0 0.0
    %233 = vmatmul.mubr.f32.gmra.mrb[0].mxu0 %v166
    %v234 = vpop.f32.mrb[0].mxu0
    %v235 = vadd.f32 %v162, %v234
    %v236 = vpop.f32.mrb[0].mxu0
    %237 = vdwg.mxu0
    %vm238 = vcmask 25600
    %v239 = vsel %vm238, %v235, -inf
    %240 = vmax.xlane.f32.xlu0 %v239
    %v241 = vpop.xlane.xlu0 %240
    %v242 = vsub.f32 %v235, %v241
    %v243 = vmul.f32 %v242, 1.442695
    %v244 = vpow.pop %v243
    %v245 = vsel %vm238, %v244, 0.0
    %246 = vadd.xlane.f32.xlu0 %v245
    %v247 = vpop.xlane.xlu0 %246
    %v248 = vlog2.pop %v247
    %v249 = vmul.f32 %v248, 0.6931472
    %v250 = vsub.f32 %v242, %v249
    %251 = vst.msk [vmem:[#allocation2] sm:$0x3] %vm238, %v250
    // Predicated region
    $region22: #{clf_v1_forward.1} parent=1 // pred_check
      _
    $region23: #{clf_v1_forward.1} parent=1 // pred_check_branch
      %253 = sbr.rel (0) target = $region25
    $region24: #{clf_v1_forward.1} parent=1 // pred_region
      %s255 = ssub.s32 32, 32
      %256 = vsyncadd [#allocation3], %s255
      %s258 = sshll.u32 [#allocation2], 4
      %s259 = int_to_ptr.vmem [resolvable:$true] %s258
      %261 = dma.vmem_to_hbm [thread:$0]  %s259, 32, %s5, [#allocation3]
    $region25: #{clf_v1_forward.1} parent=1 // pred_fallthru
      _
    // Predicated region
    $region26: #{clf_v1_forward.1} parent=1 // pred_check
      _
    $region27: #{clf_v1_forward.1} parent=1 // pred_check_branch
      %263 = sbr.rel (0) target = $region29
    $region28: #{clf_v1_forward.1} parent=1 // pred_region
      %264 = dma.done [#allocation3], 32
    $region29: #{clf_v1_forward.1} parent=1 // pred_fallthru
      _
    %265 = vsyncpa [#allocation3], 1

</llo_original>
